<compile_context>
chip_gen: v7x
topology: tpu7x:2x2x1
jax: 0.10.0
libtpu: 0.0.40
codegen_flags: <defaults>
</compile_context>

<pallas_src>
import functools

import jax
import jax.numpy as jnp
from jax.experimental import pallas as pl
from jax.experimental.pallas import tpu as pltpu


# ------------------------------- kernel bodies -------------------------------
def _accumulate_grams(x_ref, acc_ref, *, fold, N, C, ts, S, mxu_dtype):
    """Accumulate the (cross-)gram matrices for one (batch, spatial-chunk) block."""
    k = pl.program_id(1)

    @pl.when(k == 0)
    def _():
        acc_ref[...] = jnp.zeros_like(acc_ref)

    x = x_ref[...]                                            # (N, C, ts)

    if S % ts != 0:
        # Tail block: the out-of-bounds lanes of the last spatial block are
        # unspecified memory, so zero them in-kernel (no HBM pad pass).  For
        # non-last blocks `valid >= ts`, so the mask is a no-op.
        col = jax.lax.broadcasted_iota(jnp.int32, x.shape, 2)
        valid = S - k * ts
        x = jnp.where(col < valid, x, jnp.zeros_like(x))

    if mxu_dtype is not None and x.dtype != mxu_dtype:
        # In-kernel cast (e.g. bf16) for full MXU rate; accumulation stays f32
        # and the HBM read stays in the input's native dtype.
        x = x.astype(mxu_dtype)

    if fold:
        # One MXU-filling matmul per step: (N*C, ts) @ (N*C, ts)^T.
        x2 = x.reshape(N * C, ts)
        acc_ref[...] += jax.lax.dot_general(
            x2, x2, (((1,), (1,)), ((), ())),
            preferred_element_type=jnp.float32)               # (N*C, N*C)
    else:
        acc_ref[...] += jnp.einsum(
            "ncs,nds->ncd", x, x, preferred_element_type=jnp.float32)  # (N,C,C)


def _pairwise_normalized(acc_ref, *, fold, N, C, count):
    """sum_{a != b} gh_a * gh_b / count with gh_n = g_n / |g_n|_F, shape (C, C)."""
    s1 = jnp.zeros((C, C), jnp.float32)
    s2 = jnp.zeros((C, C), jnp.float32)
    for n in range(N):                       # N is small and static: unrolled
        if fold:
            g = acc_ref[n * C:(n + 1) * C, n * C:(n + 1) * C]   # diagonal block
        else:
            g = acc_ref[n]
        # rsqrt -> EUP; NaN/inf if a gram is all-zero, matching the PyTorch
        # divide-by-zero behaviour of the reference.
        gh = g * jax.lax.rsqrt(jnp.sum(g * g, keepdims=True))
        s1 = s1 + gh
        s2 = s2 + gh * gh
    # sum_{a != b} gh_a gh_b == (sum_a gh_a)^2 - sum_a gh_a^2   (O(N), exact).
    return (s1 * s1 - s2) * (1.0 / count)


def _diversity_sum_kernel(x_ref, sum_ref, acc_ref, *,
                          fold, N, C, ts, S, count, mxu_dtype):
    # x_ref  : (N, C, ts) -- one spatial chunk of all branches, one batch elem
    # sum_ref: (8, 128)   -- lane-dense per-batch sum (scalar broadcast)
    # acc_ref: VMEM scratch gram accumulator, persists across the k grid axis
    _accumulate_grams(x_ref, acc_ref, fold=fold, N=N, C=C, ts=ts, S=S,
                      mxu_dtype=mxu_dtype)

    @pl.when(pl.program_id(1) == pl.num_programs(1) - 1)
    def _():
        res = _pairwise_normalized(acc_ref, fold=fold, N=N, C=C, count=count)
        sum_ref[...] = jnp.zeros(sum_ref.shape, jnp.float32) + jnp.sum(res)


def _diversity_res_kernel(x_ref, res_ref, acc_ref, *,
                          fold, N, C, Cp, ts, S, count, mxu_dtype):
    # res_ref: (C, Cp) -- un-reduced per-batch result, lane-padded to Cp lanes
    _accumulate_grams(x_ref, acc_ref, fold=fold, N=N, C=C, ts=ts, S=S,
                      mxu_dtype=mxu_dtype)

    @pl.when(pl.program_id(1) == pl.num_programs(1) - 1)
    def _():
        res = _pairwise_normalized(acc_ref, fold=fold, N=N, C=C, count=count)
        if Cp == C:
            res_ref[...] = res
        else:
            # Lane-pad the tiny per-batch result so the HBM writeback uses
            # full 128-lane rows (dense DMA); the wrapper slices [:, :C].
            res_ref[...] = jnp.zeros((C, Cp), jnp.float32)
            res_ref[:, :C] = res


# --------------------------------- wrapper -----------------------------------
def _vmem_capacity_bytes():
    try:
        return int(pltpu.get_tpu_info().vmem_capacity_bytes)
    except Exception:
        return 64 << 20          # conservative fallback (v7x physical VMEM)


def _pick_spatial_tile(S, max_ts):
    if S <= max_ts:
        return S                  # single block: no lane-alignment requirement
    cap = max(128, (max_ts // 128) * 128)
    ts = cap
    while ts >= 128:              # prefer a tile that divides S (no tail mask)
        if S % ts == 0:
            return ts
        ts -= 128
    return cap                    # tail handled by in-kernel masking


def diversity_loss(x, *, size_average=True, use_gram=True, reduce=True,
                   spatial_tile=None, mxu_dtype=None, fold_branches=None,
                   input_buffers=2, vmem_limit_bytes=None):
    """x: (N, B, C, H, W); N = number of branches (torch iterates over dim 0).

    mxu_dtype: optional in-kernel matmul dtype (e.g. jnp.bfloat16).  The cast
    happens inside the kernel so HBM traffic stays in the input's native dtype
    and the gram accumulation stays f32.
    """
    if not use_gram:
        # TODO(synk): use_gram=False path (mats = x.view(B, -1)) not implemented.
        raise NotImplementedError("only use_gram=True is implemented")

    N, B, C, H, W = x.shape
    S = H * W
    assert N >= 2, "DiversityLoss needs at least two branches"
    count = N * (N - 1)

    # Natural layout: metadata-only reshape, no transpose / pad / astype pass.
    xf = x.reshape(N, B, C, S)
    in_itemsize = jnp.dtype(xf.dtype).itemsize

    # Fold branches into one MXU-filling matmul when the merged matrix fits the
    # MXU width and the (N, C, ts)->(N*C, ts) reshape is sublane-aligned.
    if fold_branches is None:
        fold = (N * C <= 256) and (C % 8 == 0)
    else:
        fold = bool(fold_branches)
    scratch_shape = (N * C, N * C) if fold else (N, C, C)
    scratch_elems = (N * C) * (N * C) if fold else N * C * C
    scratch_bytes = 4 * scratch_elems

    Cp = C if C % 128 == 0 else ((C + 127) // 128) * 128      # lane-padded width
    out_block_bytes = (8 * 128 * 4) if reduce else (C * Cp * 4)

    # Generation-aware VMEM budget: ~3/4 of physical capacity (96 MiB on
    # v5e/v6e, 48 MiB on v7x), minus the persistent gram scratch, the
    # double-buffered output blocks and some headroom.
    cap = _vmem_capacity_bytes()
    if vmem_limit_bytes is None:
        limit = int(min(cap * 3 // 4, 96 << 20))
    else:
        limit = int(vmem_limit_bytes)
    headroom = 2 << 20
    input_budget = limit - scratch_bytes - 2 * out_block_bytes - headroom
    input_budget = max(input_budget, 2 * N * C * 128 * in_itemsize)
    max_ts = input_budget // (2 * N * C * in_itemsize)

    if spatial_tile is not None:
        ts = min(int(spatial_tile), S)
        if ts < S:
            ts = max(128, (ts // 128) * 128)                  # lane-aligned
            ts = min(ts, max(128, (max_ts // 128) * 128))     # per-gen cap
    else:
        ts = _pick_spatial_tile(S, max_ts)
    nk = -(-S // ts)

    needed = 2 * N * C * ts * in_itemsize + scratch_bytes + 2 * out_block_bytes \
        + headroom
    vmem_limit = int(max(limit, needed))

    grid = (B, nk)                     # batch parallel; spatial reduction last
    bs_kwargs = {}
    if input_buffers != 2:             # deepen only if profiling shows exposed DMA
        bs_kwargs["pipeline_mode"] = pl.Buffered(int(input_buffers))
    in_specs = [pl.BlockSpec((N, pl.Squeezed(), C, ts),
                             lambda b, k: (0, b, 0, k), **bs_kwargs)]
    scratch_shapes = [pltpu.VMEM(scratch_shape, jnp.float32)]
    compiler_params = pltpu.CompilerParams(
        dimension_semantics=("parallel", "arbitrary"),
        vmem_limit_bytes=vmem_limit)

    common = dict(fold=fold, N=N, C=C, ts=ts, S=S, count=count,
                  mxu_dtype=mxu_dtype)

    if reduce:
        kernel = functools.partial(_diversity_sum_kernel, **common)
        sums = pl.pallas_call(
            kernel,
            out_shape=jax.ShapeDtypeStruct((B, 8, 128), jnp.float32),
            grid_spec=pltpu.PrefetchScalarGridSpec(
                num_scalar_prefetch=0, grid=grid, in_specs=in_specs,
                out_specs=pl.BlockSpec((pl.Squeezed(), 8, 128),
                                       lambda b, k: (b, 0, 0)),
                scratch_shapes=scratch_shapes),
            compiler_params=compiler_params,
        )(xf)
        total = jnp.sum(sums[:, 0, 0])
        if size_average:
            return total / (B * C * C)
        return total

    kernel = functools.partial(_diversity_res_kernel, Cp=Cp, **common)
    res = pl.pallas_call(
        kernel,
        out_shape=jax.ShapeDtypeStruct((B, C, Cp), jnp.float32),
        grid_spec=pltpu.PrefetchScalarGridSpec(
            num_scalar_prefetch=0, grid=grid, in_specs=in_specs,
            out_specs=pl.BlockSpec((pl.Squeezed(), C, Cp),
                                   lambda b, k: (b, 0, 0)),
            scratch_shapes=scratch_shapes),
        compiler_params=compiler_params,
    )(xf)
    if Cp != C:
        res = res[:, :, :C]
    return res


# ----------------------------- pure-JAX reference -----------------------------
def _reference_res(x):
    # Mirrors the PyTorch forward with reduce=False.
    N, B, C, H, W = x.shape
    feats = x.reshape(N, B, C, H * W).astype(jnp.float32)
    grams = jnp.einsum("nbcs,nbds->nbcd", feats, feats)
    norms = jnp.sqrt(jnp.sum(grams * grams, axis=(2, 3)))            # (N, B)
    res = jnp.zeros((B, C, C), jnp.float32)
    count = 0
    for a in range(N):
        for b in range(N):
            if a != b:
                res = res + grams[a] * grams[b] / (norms[a] * norms[b])[:, None, None]
                count += 1
    return res / count


def _reference_mean(x):
    return jnp.mean(_reference_res(x))


if __name__ == "__main__":
    key = jax.random.PRNGKey(0)
    k1, k2 = jax.random.split(key)

    # Test 1: unfolded path (C % 8 != 0), single spatial block, mean reduction.
    x1 = jax.random.normal(k1, (3, 2, 4, 8, 8), dtype=jnp.float32)
    out1 = jax.block_until_ready(diversity_loss(x1))
    ref1 = _reference_mean(x1)
    assert jnp.allclose(out1, ref1, rtol=1e-4, atol=1e-5), (out1, ref1)

    # Test 1b: reduce=True, size_average=False (sum reduction).
    out1s = jax.block_until_ready(diversity_loss(x1, size_average=False))
    ref1s = jnp.sum(_reference_res(x1))
    assert jnp.allclose(out1s, ref1s, rtol=1e-4, atol=1e-4), (out1s, ref1s)

    # Test 2: folded-branch path (C % 8 == 0), multi-chunk spatial accumulation
    # with a non-dividing tile (exercises in-kernel tail masking, no HBM pad).
    x2 = jax.random.normal(k2, (2, 2, 8, 16, 24), dtype=jnp.float32)
    out2 = jax.block_until_ready(diversity_loss(x2, spatial_tile=256))
    ref2 = _reference_mean(x2)
    assert jnp.allclose(out2, ref2, rtol=1e-4, atol=1e-5), (out2, ref2)

    # Test 3: un-reduced output path with lane-padded (C -> 128) writeback.
    res = jax.block_until_ready(diversity_loss(x1, reduce=False))
    res_ref = _reference_res(x1)
    assert jnp.allclose(res, res_ref, rtol=1e-4, atol=1e-4), (res, res_ref)

    # Test 4: in-kernel bf16 MXU cast (accumulation stays f32); loose tolerance.
    out4 = jax.block_until_ready(
        diversity_loss(x2, spatial_tile=128, mxu_dtype=jnp.bfloat16))
    assert jnp.allclose(out4, ref2, rtol=5e-2, atol=1e-3), (out4, ref2)

    print("KERNEL_OK")
</pallas_src>

<mosaic_0001>
module attributes {stable_mosaic.version = 11 : i64} {
  func.func @_diversity_sum_kernel(%arg0: i32, %arg1: i32, %arg2: memref<3x1x4x64xf32, #tpu.memory_space<vmem>>, %arg3: memref<1x8x128xf32, #tpu.memory_space<vmem>>, %arg4: memref<3x4x4xf32, #tpu.memory_space<vmem>>) attributes {dimension_semantics = [#tpu.dimension_semantics<parallel>, #tpu.dimension_semantics<arbitrary>], iteration_bounds = array<i64: 2, 1>, scalar_prefetch = 0 : i64, scratch_operands = 1 : i64, tpu.core_type = #tpu.core_type<tc>, window_params = [{transform_indices = @transform_0, window_bounds = array<i64: 3, 1, 4, 64>}, {transform_indices = @transform_1, window_bounds = array<i64: 1, 8, 128>}]} {
    %c0_i32 = arith.constant 0 : i32
    %0 = arith.cmpi eq, %arg1, %c0_i32 : i32
    %1 = arith.extui %0 : i1 to i32
    %c0_i32_0 = arith.constant 0 : i32
    %2 = arith.cmpi ne, %1, %c0_i32_0 : i32
    scf.if %2 {
      %cst_12 = arith.constant 0.000000e+00 : f32
      %12 = vector.broadcast %cst_12 : f32 to vector<3x4x4xf32>
      %c0_13 = arith.constant 0 : index
      %c0_14 = arith.constant 0 : index
      %c0_15 = arith.constant 0 : index
      %13 = vector.load %arg4[%c0_13, %c0_14, %c0_15] : memref<3x4x4xf32, #tpu.memory_space<vmem>>, vector<3x4x4xf32>
      tpu.vector_store %arg4[%c0_13, %c0_14, %c0_15], %12 {strides = array<i32>} : memref<3x4x4xf32, #tpu.memory_space<vmem>>, vector<3x4x4xf32>,
    } else {
    }
    %c0 = arith.constant 0 : index
    %c0_1 = arith.constant 0 : index
    %c0_2 = arith.constant 0 : index
    %c0_3 = arith.constant 0 : index
    %3 = vector.load %arg2[%c0, %c0_1, %c0_2, %c0_3] : memref<3x1x4x64xf32, #tpu.memory_space<vmem>>, vector<3x1x4x64xf32>
    %4 = vector.shape_cast %3 : vector<3x1x4x64xf32> to vector<3x4x64xf32>
    %c0_4 = arith.constant 0 : index
    %c0_5 = arith.constant 0 : index
    %c0_6 = arith.constant 0 : index
    %5 = vector.load %arg4[%c0_4, %c0_5, %c0_6] : memref<3x4x4xf32, #tpu.memory_space<vmem>>, vector<3x4x4xf32>
    "tpu.trace_start"() <{level = 10 : i32, message = "ncs,nds->ncd"}> : () -> ()
    %cst = arith.constant dense<0.000000e+00> : vector<3x4x4xf32>
    %6 = tpu.matmul %4, %4, %cst {dimension_numbers = #tpu.dot_dimension_numbers<[2], [2], [1], [1], [0, 0, 0, 1, 1, 1], [0], [0]>} : vector<3x4x64xf32>, vector<3x4x64xf32>, vector<3x4x4xf32> -> vector<3x4x4xf32>
    "tpu.trace_stop"() : () -> ()
    %7 = arith.addf %5, %6 : vector<3x4x4xf32>
    %c0_7 = arith.constant 0 : index
    %c0_8 = arith.constant 0 : index
    %c0_9 = arith.constant 0 : index
    %8 = vector.load %arg4[%c0_7, %c0_8, %c0_9] : memref<3x4x4xf32, #tpu.memory_space<vmem>>, vector<3x4x4xf32>
    tpu.vector_store %arg4[%c0_7, %c0_8, %c0_9], %7 {strides = array<i32>} : memref<3x4x4xf32, #tpu.memory_space<vmem>>, vector<3x4x4xf32>,
    %c0_i32_10 = arith.constant 0 : i32
    %9 = arith.cmpi eq, %arg1, %c0_i32_10 : i32
    %10 = arith.extui %9 : i1 to i32
    %c0_i32_11 = arith.constant 0 : i32
    %11 = arith.cmpi ne, %10, %c0_i32_11 : i32
    scf.if %11 {
      %cst_12 = arith.constant 0.000000e+00 : f32
      %12 = vector.broadcast %cst_12 : f32 to vector<4x4xf32>
      %cst_13 = arith.constant 0.000000e+00 : f32
      %13 = vector.broadcast %cst_13 : f32 to vector<4x4xf32>
      %c0_14 = arith.constant 0 : index
      %c0_15 = arith.constant 0 : index
      %c0_16 = arith.constant 0 : index
      %14 = vector.load %arg4[%c0_14, %c0_15, %c0_16] : memref<3x4x4xf32, #tpu.memory_space<vmem>>, vector<1x4x4xf32>
      %15 = vector.shape_cast %14 : vector<1x4x4xf32> to vector<4x4xf32>
      %16 = arith.mulf %15, %15 : vector<4x4xf32>
      %17 = vector.shape_cast %16 : vector<4x4xf32> to vector<1x4x4xf32>
      %cst_17 = arith.constant dense<0.000000e+00> : vector<1xf32>
      %18 = vector.multi_reduction <add>, %17, %cst_17 [1, 2] : vector<1x4x4xf32> to vector<1xf32>
      %19 = vector.shape_cast %18 : vector<1xf32> to vector<1x1x1xf32>
      %20 = vector.extract %19[0, 0, 0] : f32 from vector<1x1x1xf32>
      %21 = vector.broadcast %20 : f32 to vector<1x1xf32>
      %22 = math.rsqrt %21 : vector<1x1xf32>
      %23 = vector.broadcast %22 : vector<1x1xf32> to vector<4x4xf32>
      %24 = arith.mulf %15, %23 : vector<4x4xf32>
      %25 = arith.addf %12, %24 : vector<4x4xf32>
      %26 = arith.mulf %24, %24 : vector<4x4xf32>
      %27 = arith.addf %13, %26 : vector<4x4xf32>
      %c1 = arith.constant 1 : index
      %c0_18 = arith.constant 0 : index
      %c0_19 = arith.constant 0 : index
      %28 = vector.load %arg4[%c1, %c0_18, %c0_19] : memref<3x4x4xf32, #tpu.memory_space<vmem>>, vector<1x4x4xf32>
      %29 = vector.shape_cast %28 : vector<1x4x4xf32> to vector<4x4xf32>
      %30 = arith.mulf %29, %29 : vector<4x4xf32>
      %31 = vector.shape_cast %30 : vector<4x4xf32> to vector<1x4x4xf32>
      %cst_20 = arith.constant dense<0.000000e+00> : vector<1xf32>
      %32 = vector.multi_reduction <add>, %31, %cst_20 [1, 2] : vector<1x4x4xf32> to vector<1xf32>
      %33 = vector.shape_cast %32 : vector<1xf32> to vector<1x1x1xf32>
      %34 = vector.extract %33[0, 0, 0] : f32 from vector<1x1x1xf32>
      %35 = vector.broadcast %34 : f32 to vector<1x1xf32>
      %36 = math.rsqrt %35 : vector<1x1xf32>
      %37 = vector.broadcast %36 : vector<1x1xf32> to vector<4x4xf32>
      %38 = arith.mulf %29, %37 : vector<4x4xf32>
      %39 = arith.addf %25, %38 : vector<4x4xf32>
      %40 = arith.mulf %38, %38 : vector<4x4xf32>
      %41 = arith.addf %27, %40 : vector<4x4xf32>
      %c2 = arith.constant 2 : index
      %c0_21 = arith.constant 0 : index
      %c0_22 = arith.constant 0 : index
      %42 = vector.load %arg4[%c2, %c0_21, %c0_22] : memref<3x4x4xf32, #tpu.memory_space<vmem>>, vector<1x4x4xf32>
      %43 = vector.shape_cast %42 : vector<1x4x4xf32> to vector<4x4xf32>
      %44 = arith.mulf %43, %43 : vector<4x4xf32>
      %45 = vector.shape_cast %44 : vector<4x4xf32> to vector<1x4x4xf32>
      %cst_23 = arith.constant dense<0.000000e+00> : vector<1xf32>
      %46 = vector.multi_reduction <add>, %45, %cst_23 [1, 2] : vector<1x4x4xf32> to vector<1xf32>
      %47 = vector.shape_cast %46 : vector<1xf32> to vector<1x1x1xf32>
      %48 = vector.extract %47[0, 0, 0] : f32 from vector<1x1x1xf32>
      %49 = vector.broadcast %48 : f32 to vector<1x1xf32>
      %50 = math.rsqrt %49 : vector<1x1xf32>
      %51 = vector.broadcast %50 : vector<1x1xf32> to vector<4x4xf32>
      %52 = arith.mulf %43, %51 : vector<4x4xf32>
      %53 = arith.addf %39, %52 : vector<4x4xf32>
      %54 = arith.mulf %52, %52 : vector<4x4xf32>
      %55 = arith.addf %41, %54 : vector<4x4xf32>
      %56 = arith.mulf %53, %53 : vector<4x4xf32>
      %57 = arith.subf %56, %55 : vector<4x4xf32>
      %cst_24 = arith.constant 0.166666672 : f32
      %58 = vector.broadcast %cst_24 : f32 to vector<4x4xf32>
      %59 = arith.mulf %57, %58 : vector<4x4xf32>
      %cst_25 = arith.constant 0.000000e+00 : f32
      %60 = vector.broadcast %cst_25 : f32 to vector<8x128xf32>
      %61 = vector.shape_cast %59 : vector<4x4xf32> to vector<1x4x4xf32>
      %cst_26 = arith.constant dense<0.000000e+00> : vector<1xf32>
      %62 = vector.multi_reduction <add>, %61, %cst_26 [1, 2] : vector<1x4x4xf32> to vector<1xf32>
      %63 = vector.shape_cast %62 : vector<1xf32> to vector<1x1x1xf32>
      %64 = vector.extract %63[0, 0, 0] : f32 from vector<1x1x1xf32>
      %65 = vector.broadcast %64 : f32 to vector<8x128xf32>
      %66 = arith.addf %60, %65 : vector<8x128xf32>
      %c0_27 = arith.constant 0 : index
      %c0_28 = arith.constant 0 : index
      %c0_29 = arith.constant 0 : index
      %67 = vector.load %arg3[%c0_27, %c0_28, %c0_29] : memref<1x8x128xf32, #tpu.memory_space<vmem>>, vector<1x8x128xf32>
      %68 = vector.shape_cast %67 : vector<1x8x128xf32> to vector<8x128xf32>
      %69 = vector.shape_cast %66 : vector<8x128xf32> to vector<1x8x128xf32>
      tpu.vector_store %arg3[%c0_27, %c0_28, %c0_29], %69 {strides = array<i32>} : memref<1x8x128xf32, #tpu.memory_space<vmem>>, vector<1x8x128xf32>,
    } else {
    }
    return
  }
  func.func @transform_0(%arg0: i32, %arg1: i32) -> (i32, i32, i32, i32) {
    %c0_i32 = arith.constant 0 : i32
    %c0_i32_0 = arith.constant 0 : i32
    %c0_i32_1 = arith.constant 0 : i32
    return %c0_i32, %arg0, %c0_i32_0, %arg1 : i32, i32, i32, i32
  }
  func.func @transform_1(%arg0: i32, %arg1: i32) -> (i32, i32, i32) {
    %c0_i32 = arith.constant 0 : i32
    %c0_i32_0 = arith.constant 0 : i32
    %c0_i32_1 = arith.constant 0 : i32
    return %arg0, %c0_i32, %c0_i32_0 : i32, i32, i32
  }
}

</mosaic_0001>

<llo_original>
// kernel: tpu_custom_call.1
$region0: #{tpu_custom_call.1}
  #allocation0 [shape = 'u32[]', space=smem, size = 0x4, offset = 0x4, fixed_abs, tag = 'smem constant byte address 0x4 - core index']
  #allocation1 [shape = 'u32[144,128]{1,0:T(1,128)}', space=vmem, size = 0x12000, scoped, tag = 'internal scratch']
  #allocation2 [shape = 'f32[3,4,4]{2,1,0:T(4,128)}', space=vmem, size = 0x1800, scoped, tag = 'scratch operand']
  %s0 = inlined_call_operand.hbm [shape: f32[3,2,4,64], index: 0, kind: input, shape index: {}]
  %s1 = inlined_call_operand.hbm [shape: f32[2,8,128], index: 1, kind: output, shape index: {}]
  %s2 = sld [smem:[#allocation0]]
  $region49: #{tpu_custom_call.1} parent=0
    _
  %s4 = ssub.s32 1, %s2
  %s5 = scalar_select 0, %s4, %s2
  $region1: #{tpu_custom_call.1} parent=0
    #allocation3 [shape = 'u8[12288]{0}', space=vmem, size = 0x3000, scoped, tag = 'input window, operand 0']
    #allocation4 [shape = 's32[2]{0}', space=sflag, size = 0x8, scoped, tag = 'scoped memory for tpu_custom_call.1']
    #allocation5 [shape = 's32[2]{0}', space=sflag, size = 0x8, scoped, tag = 'scoped memory for tpu_custom_call.1']
    #allocation6 [shape = 'u8[8192]{0}', space=vmem, size = 0x2000, scoped, tag = 'output window, operand 0']
    %6 = vsyncpa [#allocation4], 0
    %s7 = scalar_lea.sflag [#allocation4], 1
    %8 = vsyncpa %s7, 0
    %9 = vsyncpa [#allocation5], 0
    %s10 = scalar_lea.sflag [#allocation5], 1
    %11 = vsyncpa %s10, 0
    loop: start=0, step=1, limit=4
    $region2: #{tpu_custom_call.1} parent=1 // loop_pre_header
      _
    $region3: #{tpu_custom_call.1} parent=1 // loop_header
      %s13 = sphi 0, %s17
      %p14 = scmp.ge.s32.totalorder %s13, 4
      %s20 = sphi 0, %s32
      %s21 = sphi 0, %s28
      %s22 = sphi 0, %s20
      %s23 = sphi 0, %s21
      %s24 = sphi 0, %s22
      %s25 = sphi 0, %s23
      %s37 = sphi 0, %s39
      %s40 = sphi 0, %s37
      %s41 = sphi 0, %s40
      %s57 = sphi 0, %s41
      %s63 = sphi 0, %s65
      %s66 = sphi 0, %s63
      %s67 = sphi 0, %s66
      %s83 = sphi 0, %s67
    $region4: #{tpu_custom_call.1} parent=1 // loop_header_branch
      %16 = sbr.rel (%p14) target = $region8
    $region5: #{tpu_custom_call.1} parent=1 // loop_body
      %s18 = ssub.s32 %s13, 1
      %s19 = ssub.s32 %s13, 2
      %s26 = sadd.s32 1, %s21
      %p27 = scmp.ge.s32.totalorder %s26, 1
      %s28 = scalar_select %p27, 0, %s26
      %s29 = sadd.s32 1, %s20
      %s30 = scalar_select %p27, %s29, %s20
      %p31 = scmp.ge.s32.totalorder %s30, 2
      %s32 = scalar_select %p31, 0, %s30
      %s33 = ssub.s32 %s20, %s32
      %s34 = ssub.s32 %s21, %s28
      %s35 = sor.u32 %s33, %s34
      %p36 = scmp.eq.s32.totalorder %s35, 0
      %s38 = sadd.s32 %s37, 1
      %s39 = scalar_select %p36, %s37, %s38
      %p42 = pneg %p36
      %p43 = scmp.eq.s32.totalorder %s13, 1
      %p44 = por %p42, %p43
      %p45 = scmp.ne.s32.totalorder %s37, %s40
      %p46 = scmp.eq.s32.totalorder %s13, 0
      %p47 = por %p45, %p46
      %p48 = scmp.ne.s32.totalorder %s37, %s40
      %p49 = scmp.eq.s32.totalorder %s18, 1
      %p50 = por %p48, %p49
      %p51 = scmp.ne.s32.totalorder %s40, %s41
      %p52 = scmp.eq.s32.totalorder %s18, 0
      %p53 = por %p51, %p52
      %p54 = scmp.ne.s32.totalorder %s40, %s41
      %p55 = scmp.eq.s32.totalorder %s19, 1
      %p56 = por %p54, %p55
      %p58 = scmp.ne.s32.totalorder %s41, %s57
      %p59 = scmp.eq.s32.totalorder %s19, 0
      %p60 = por %p58, %p59
      %s61 = ssub.s32 %s20, %s32
      %p62 = scmp.eq.s32.totalorder %s61, 0
      %s64 = sadd.s32 %s63, 1
      %s65 = scalar_select %p62, %s63, %s64
      %p68 = pneg %p62
      %p69 = scmp.eq.s32.totalorder %s13, 1
      %p70 = por %p68, %p69
      %p71 = scmp.ne.s32.totalorder %s63, %s66
      %p72 = scmp.eq.s32.totalorder %s13, 0
      %p73 = por %p71, %p72
      %p74 = scmp.ne.s32.totalorder %s63, %s66
      %p75 = scmp.eq.s32.totalorder %s18, 1
      %p76 = por %p74, %p75
      %p77 = scmp.ne.s32.totalorder %s66, %s67
      %p78 = scmp.eq.s32.totalorder %s18, 0
      %p79 = por %p77, %p78
      %p80 = scmp.ne.s32.totalorder %s66, %s67
      %p81 = scmp.eq.s32.totalorder %s19, 1
      %p82 = por %p80, %p81
      %p84 = scmp.ne.s32.totalorder %s67, %s83
      %p85 = scmp.eq.s32.totalorder %s19, 0
      %p86 = por %p84, %p85
      %p87 = scmp.le.s32.totalorder 1, %s13
      %p88 = scmp.lt.s32.totalorder %s13, 3
      %p89 = pnand %p87, %p88
      %p90 = pneg %p89
      // Predicated region
      $region9: #{tpu_custom_call.1} parent=5 // pred_check
        _
      $region10: #{tpu_custom_call.1} parent=5 // pred_check_branch
        %92 = sbr.rel (%p89) target = $region12
      $region11: #{tpu_custom_call.1} parent=5 // pred_region
        %s93 = ssub.s32 %s13, 1
      $region12: #{tpu_custom_call.1} parent=5 // pred_fallthru
        _
      %p94 = scmp.lt.s32.totalorder %s13, 2
      // Predicated region
      $region13: #{tpu_custom_call.1} parent=5 // pred_check
        %p95 = pneg %p94
      $region14: #{tpu_custom_call.1} parent=5 // pred_check_branch
        %97 = sbr.rel (%p95) target = $region16
      $region15: #{tpu_custom_call.1} parent=5 // pred_region
        // Predicated region
        $region17: #{tpu_custom_call.1} parent=15 // pred_check
          %p98 = pneg %p47
        $region18: #{tpu_custom_call.1} parent=15 // pred_check_branch
          %100 = sbr.rel (%p98) target = $region20
        $region19: #{tpu_custom_call.1} parent=15 // pred_region
          %s101 = sand.u32 %s37, 1
          %s102 = scalar_lea.sflag [#allocation4], %s101
          %s103 = sand.u32 %s37, 1
          %s104 = smul.addr %s103, 12
          %s105 = scalar_lea.vmem [#allocation3], %s104
          %s107 = ssub.s32 192, 192
          %108 = vsyncadd %s102, %s107
          %s109 = sadd.s32 %s21, %s20
          %s110 = smul.addr %s109, 64
          %s111 = scalar_lea.hbm %s0, %s110
          %s112 = sshll.u32 %s105, 4
          %s113 = int_to_ptr.vmem [resolvable:$true] %s112
          %118 = dma.hbm_to_vmem [thread:$0]  %s111, 192, %s113, %s102, 128, 64, 4
        $region20: #{tpu_custom_call.1} parent=15 // pred_fallthru
          _
      $region16: #{tpu_custom_call.1} parent=5 // pred_fallthru
        _
      %p119 = scmp.le.s32.totalorder 1, %s13
      %p120 = scmp.lt.s32.totalorder %s13, 3
      %p121 = pnand %p119, %p120
      %p122 = pneg %p121
      // Predicated region
      $region21: #{tpu_custom_call.1} parent=5 // pred_check
        _
      $region22: #{tpu_custom_call.1} parent=5 // pred_check_branch
        %124 = sbr.rel (%p121) target = $region24
      $region23: #{tpu_custom_call.1} parent=5 // pred_region
        %s125 = ssub.s32 %s13, 1
        %s126 = sand.u32 %s40, 1
        %s127 = scalar_lea.sflag [#allocation4], %s126
        %s128 = sand.u32 %s40, 1
        %s129 = smul.addr %s128, 12
        %s130 = scalar_lea.vmem [#allocation3], %s129
        // Predicated region
        $region25: #{tpu_custom_call.1} parent=23 // pred_check
          %p131 = pneg %p53
        $region26: #{tpu_custom_call.1} parent=23 // pred_check_branch
          %133 = sbr.rel (%p131) target = $region28
        $region27: #{tpu_custom_call.1} parent=23 // pred_region
          %134 = dma.done %s127, 192
        $region28: #{tpu_custom_call.1} parent=23 // pred_fallthru
          _
        %s135 = sand.u32 %s40, 1
        %s136 = scalar_lea.sflag [#allocation4], %s135
        %s137 = sand.u32 %s40, 1
        %s138 = smul.addr %s137, 12
        %s139 = scalar_lea.vmem [#allocation3], %s138
        %p140 = pneg %p53
        %p141 = pneg %p50
        %p142 = pneg %p79
        %p143 = pneg %p76
        %s144 = sand.u32 %s66, 1
        %s145 = scalar_lea.sflag [#allocation5], %s144
        %s146 = sand.u32 %s66, 1
        %s147 = smul.addr %s146, 8
        %s148 = scalar_lea.vmem [#allocation6], %s147
        %p149 = scmp.eq.s32.totalorder %s23, 0
        // Predicated region
        $region29: #{tpu_custom_call.1} parent=23 // pred_check
          %p150 = pneg %p149
        $region30: #{tpu_custom_call.1} parent=23 // pred_check_branch
          %152 = sbr.rel (%p150) target = $region32
        $region31: #{tpu_custom_call.1} parent=23 // pred_region
          %vm153 = vcmask 27648
          %154 = vst.msk [vmem:[#allocation2] sm:$0xf] %vm153, 0.0
          %155 = vst.msk [vmem:[#allocation2 + $0x4] sm:$0xf] %vm153, 0.0
          %156 = vst.msk [vmem:[#allocation2 + $0x8] sm:$0xf] %vm153, 0.0
        $region32: #{tpu_custom_call.1} parent=23 // pred_fallthru
          _
        %v157 = vld [vmem:[%s130] sm:$0xf]
        %v158 = vld [vmem:[%s130 + $0x4] sm:$0xf]
        %v159 = vld [vmem:[%s130 + $0x8] sm:$0xf]
        %v160 = vld [vmem:[#allocation2] sm:$0xf]
        %v161 = vld [vmem:[#allocation2 + $0x4] sm:$0xf]
        %v162 = vld [vmem:[#allocation2 + $0x8] sm:$0xf]
        %vm163 = vcmask 523264
        %v165 = vsel %vm163, %v157, 0
        %167 = vmatprep.subr.mxu0 0.0
        %168 = vmatpush1.xpose.msra.mxu0 %v165
        %169 = vmatprep.subr.mxu0 0.0
        %170 = vmatpush1.xpose.msra.mxu0 0.0
        %171 = vmatprep.subr.mxu0 0.0
        %172 = vmatpush1.xpose.msra.mxu0 0.0
        %173 = vmatprep.subr.mxu0 0.0
        %174 = vmatpush1.xpose.msra.mxu0 0.0
        %175 = vmatprep.subr.mxu0 0.0
        %176 = vmatpush1.xpose.msra.mxu0 0.0
        %177 = vmatprep.subr.mxu0 0.0
        %178 = vmatpush1.xpose.msra.mxu0 0.0
        %179 = vmatprep.subr.mxu0 0.0
        %180 = vmatpush1.xpose.msra.mxu0 0.0
        %181 = vmatprep.subr.mxu0 0.0
        %182 = vmatpush1.xpose.msra.mxu0 0.0
        %183 = vmatprep.subr.mxu0 0.0
        %184 = vmatpush1.xpose.msra.mxu0 0.0
        %185 = vmatprep.subr.mxu0 0.0
        %186 = vmatpush1.xpose.msra.mxu0 0.0
        %187 = vmatprep.subr.mxu0 0.0
        %188 = vmatpush1.xpose.msra.mxu0 0.0
        %189 = vmatprep.subr.mxu0 0.0
        %190 = vmatpush1.xpose.msra.mxu0 0.0
        %191 = vmatprep.subr.mxu0 0.0
        %192 = vmatpush1.xpose.msra.mxu0 0.0
        %193 = vmatprep.subr.mxu0 0.0
        %194 = vmatpush1.xpose.msra.mxu0 0.0
        %195 = vmatprep.subr.mxu0 0.0
        %196 = vmatpush1.xpose.msra.mxu0 0.0
        %197 = vmatprep.subr.mxu0 0.0
        %198 = vmatpush1.xpose.msra.mxu0 0.0
        %199 = vmatprep.subr.mxu0 0.0
        %200 = vmatpush1.xpose.msra.mxu0 0.0
        %201 = vmatprep.subr.mxu0 0.0
        %202 = vmatpush1.xpose.msra.mxu0 0.0
        %203 = vmatprep.subr.mxu0 0.0
        %204 = vmatpush1.xpose.msra.mxu0 0.0
        %205 = vmatprep.subr.mxu0 0.0
        %206 = vmatpush1.xpose.msra.mxu0 0.0
        %207 = vmatprep.subr.mxu0 0.0
        %208 = vmatpush1.xpose.msra.mxu0 0.0
        %209 = vmatprep.subr.mxu0 0.0
        %210 = vmatpush1.xpose.msra.mxu0 0.0
        %211 = vmatprep.subr.mxu0 0.0
        %212 = vmatpush1.xpose.msra.mxu0 0.0
        %213 = vmatprep.subr.mxu0 0.0
        %214 = vmatpush1.xpose.msra.mxu0 0.0
        %215 = vmatprep.subr.mxu0 0.0
        %216 = vmatpush1.xpose.msra.mxu0 0.0
        %217 = vmatprep.subr.mxu0 0.0
        %218 = vmatpush1.xpose.msra.mxu0 0.0
        %219 = vmatprep.subr.mxu0 0.0
        %220 = vmatpush1.xpose.msra.mxu0 0.0
        %221 = vmatprep.subr.mxu0 0.0
        %222 = vmatpush1.xpose.msra.mxu0 0.0
        %223 = vmatprep.subr.mxu0 0.0
        %224 = vmatpush1.xpose.msra.mxu0 0.0
        %225 = vmatprep.subr.mxu0 0.0
        %226 = vmatpush1.xpose.msra.mxu0 0.0
        %227 = vmatprep.subr.mxu0 0.0
        %228 = vmatpush1.xpose.msra.mxu0 0.0
        %229 = vmatprep.subr.mxu0 0.0
        %230 = vmatpush1.xpose.msra.mxu0 0.0
        %231 = vmatprep.mubr.f32.mxu0 0.0
        %232 = vmatmul.mubr.f32.gmra.mrb[0].mxu0 %v165
        %v233 = vpop.f32.mrb[0].mxu0
        %v234 = vadd.f32 0.0, %v233
        %v235 = vpop.f32.mrb[0].mxu0
        %236 = vdwg.mxu0
        %v238 = vsel %vm163, %v158, 0
        %240 = vmatprep.subr.mxu0 0.0
        %241 = vmatpush1.xpose.msra.mxu0 %v238
        %242 = vmatprep.subr.mxu0 0.0
        %243 = vmatpush1.xpose.msra.mxu0 0.0
        %244 = vmatprep.subr.mxu0 0.0
        %245 = vmatpush1.xpose.msra.mxu0 0.0
        %246 = vmatprep.subr.mxu0 0.0
        %247 = vmatpush1.xpose.msra.mxu0 0.0
        %248 = vmatprep.subr.mxu0 0.0
        %249 = vmatpush1.xpose.msra.mxu0 0.0
        %250 = vmatprep.subr.mxu0 0.0
        %251 = vmatpush1.xpose.msra.mxu0 0.0
        %252 = vmatprep.subr.mxu0 0.0
        %253 = vmatpush1.xpose.msra.mxu0 0.0
        %254 = vmatprep.subr.mxu0 0.0
        %255 = vmatpush1.xpose.msra.mxu0 0.0
        %256 = vmatprep.subr.mxu0 0.0
        %257 = vmatpush1.xpose.msra.mxu0 0.0
        %258 = vmatprep.subr.mxu0 0.0
        %259 = vmatpush1.xpose.msra.mxu0 0.0
        %260 = vmatprep.subr.mxu0 0.0
        %261 = vmatpush1.xpose.msra.mxu0 0.0
        %262 = vmatprep.subr.mxu0 0.0
        %263 = vmatpush1.xpose.msra.mxu0 0.0
        %264 = vmatprep.subr.mxu0 0.0
        %265 = vmatpush1.xpose.msra.mxu0 0.0
        %266 = vmatprep.subr.mxu0 0.0
        %267 = vmatpush1.xpose.msra.mxu0 0.0
        %268 = vmatprep.subr.mxu0 0.0
        %269 = vmatpush1.xpose.msra.mxu0 0.0
        %270 = vmatprep.subr.mxu0 0.0
        %271 = vmatpush1.xpose.msra.mxu0 0.0
        %272 = vmatprep.subr.mxu0 0.0
        %273 = vmatpush1.xpose.msra.mxu0 0.0
        %274 = vmatprep.subr.mxu0 0.0
        %275 = vmatpush1.xpose.msra.mxu0 0.0
        %276 = vmatprep.subr.mxu0 0.0
        %277 = vmatpush1.xpose.msra.mxu0 0.0
        %278 = vmatprep.subr.mxu0 0.0
        %279 = vmatpush1.xpose.msra.mxu0 0.0
        %280 = vmatprep.subr.mxu0 0.0
        %281 = vmatpush1.xpose.msra.mxu0 0.0
        %282 = vmatprep.subr.mxu0 0.0
        %283 = vmatpush1.xpose.msra.mxu0 0.0
        %284 = vmatprep.subr.mxu0 0.0
        %285 = vmatpush1.xpose.msra.mxu0 0.0
        %286 = vmatprep.subr.mxu0 0.0
        %287 = vmatpush1.xpose.msra.mxu0 0.0
        %288 = vmatprep.subr.mxu0 0.0
        %289 = vmatpush1.xpose.msra.mxu0 0.0
        %290 = vmatprep.subr.mxu0 0.0
        %291 = vmatpush1.xpose.msra.mxu0 0.0
        %292 = vmatprep.subr.mxu0 0.0
        %293 = vmatpush1.xpose.msra.mxu0 0.0
        %294 = vmatprep.subr.mxu0 0.0
        %295 = vmatpush1.xpose.msra.mxu0 0.0
        %296 = vmatprep.subr.mxu0 0.0
        %297 = vmatpush1.xpose.msra.mxu0 0.0
        %298 = vmatprep.subr.mxu0 0.0
        %299 = vmatpush1.xpose.msra.mxu0 0.0
        %300 = vmatprep.subr.mxu0 0.0
        %301 = vmatpush1.xpose.msra.mxu0 0.0
        %302 = vmatprep.subr.mxu0 0.0
        %303 = vmatpush1.xpose.msra.mxu0 0.0
        %304 = vmatprep.mubr.f32.mxu0 0.0
        %305 = vmatmul.mubr.f32.gmra.mrb[0].mxu0 %v238
        %v306 = vpop.f32.mrb[0].mxu0
        %v307 = vadd.f32 0.0, %v306
        %v308 = vpop.f32.mrb[0].mxu0
        %309 = vdwg.mxu0
        %v311 = vsel %vm163, %v159, 0
        %313 = vmatprep.subr.mxu0 0.0
        %314 = vmatpush1.xpose.msra.mxu0 %v311
        %315 = vmatprep.subr.mxu0 0.0
        %316 = vmatpush1.xpose.msra.mxu0 0.0
        %317 = vmatprep.subr.mxu0 0.0
        %318 = vmatpush1.xpose.msra.mxu0 0.0
        %319 = vmatprep.subr.mxu0 0.0
        %320 = vmatpush1.xpose.msra.mxu0 0.0
        %321 = vmatprep.subr.mxu0 0.0
        %322 = vmatpush1.xpose.msra.mxu0 0.0
        %323 = vmatprep.subr.mxu0 0.0
        %324 = vmatpush1.xpose.msra.mxu0 0.0
        %325 = vmatprep.subr.mxu0 0.0
        %326 = vmatpush1.xpose.msra.mxu0 0.0
        %327 = vmatprep.subr.mxu0 0.0
        %328 = vmatpush1.xpose.msra.mxu0 0.0
        %329 = vmatprep.subr.mxu0 0.0
        %330 = vmatpush1.xpose.msra.mxu0 0.0
        %331 = vmatprep.subr.mxu0 0.0
        %332 = vmatpush1.xpose.msra.mxu0 0.0
        %333 = vmatprep.subr.mxu0 0.0
        %334 = vmatpush1.xpose.msra.mxu0 0.0
        %335 = vmatprep.subr.mxu0 0.0
        %336 = vmatpush1.xpose.msra.mxu0 0.0
        %337 = vmatprep.subr.mxu0 0.0
        %338 = vmatpush1.xpose.msra.mxu0 0.0
        %339 = vmatprep.subr.mxu0 0.0
        %340 = vmatpush1.xpose.msra.mxu0 0.0
        %341 = vmatprep.subr.mxu0 0.0
        %342 = vmatpush1.xpose.msra.mxu0 0.0
        %343 = vmatprep.subr.mxu0 0.0
        %344 = vmatpush1.xpose.msra.mxu0 0.0
        %345 = vmatprep.subr.mxu0 0.0
        %346 = vmatpush1.xpose.msra.mxu0 0.0
        %347 = vmatprep.subr.mxu0 0.0
        %348 = vmatpush1.xpose.msra.mxu0 0.0
        %349 = vmatprep.subr.mxu0 0.0
        %350 = vmatpush1.xpose.msra.mxu0 0.0
        %351 = vmatprep.subr.mxu0 0.0
        %352 = vmatpush1.xpose.msra.mxu0 0.0
        %353 = vmatprep.subr.mxu0 0.0
        %354 = vmatpush1.xpose.msra.mxu0 0.0
        %355 = vmatprep.subr.mxu0 0.0
        %356 = vmatpush1.xpose.msra.mxu0 0.0
        %357 = vmatprep.subr.mxu0 0.0
        %358 = vmatpush1.xpose.msra.mxu0 0.0
        %359 = vmatprep.subr.mxu0 0.0
        %360 = vmatpush1.xpose.msra.mxu0 0.0
        %361 = vmatprep.subr.mxu0 0.0
        %362 = vmatpush1.xpose.msra.mxu0 0.0
        %363 = vmatprep.subr.mxu0 0.0
        %364 = vmatpush1.xpose.msra.mxu0 0.0
        %365 = vmatprep.subr.mxu0 0.0
        %366 = vmatpush1.xpose.msra.mxu0 0.0
        %367 = vmatprep.subr.mxu0 0.0
        %368 = vmatpush1.xpose.msra.mxu0 0.0
        %369 = vmatprep.subr.mxu0 0.0
        %370 = vmatpush1.xpose.msra.mxu0 0.0
        %371 = vmatprep.subr.mxu0 0.0
        %372 = vmatpush1.xpose.msra.mxu0 0.0
        %373 = vmatprep.subr.mxu0 0.0
        %374 = vmatpush1.xpose.msra.mxu0 0.0
        %375 = vmatprep.subr.mxu0 0.0
        %376 = vmatpush1.xpose.msra.mxu0 0.0
        %377 = vmatprep.mubr.f32.mxu0 0.0
        %378 = vmatmul.mubr.f32.gmra.mrb[0].mxu0 %v311
        %v379 = vpop.f32.mrb[0].mxu0
        %v380 = vadd.f32 0.0, %v379
        %v381 = vpop.f32.mrb[0].mxu0
        %382 = vdwg.mxu0
        %v383 = vadd.f32 %v160, %v234
        %v384 = vadd.f32 %v161, %v307
        %v385 = vadd.f32 %v162, %v380
        %vm386 = vcmask 27648
        %387 = vst.msk [vmem:[#allocation2] sm:$0xf] %vm386, %v383
        %388 = vst.msk [vmem:[#allocation2 + $0x4] sm:$0xf] %vm386, %v384
        %389 = vst.msk [vmem:[#allocation2 + $0x8] sm:$0xf] %vm386, %v385
        // Predicated region
        $region33: #{tpu_custom_call.1} parent=23 // pred_check
          %p390 = pneg %p149
        $region34: #{tpu_custom_call.1} parent=23 // pred_check_branch
          %392 = sbr.rel (%p390) target = $region36
        $region35: #{tpu_custom_call.1} parent=23 // pred_region
          %v393 = vld [vmem:[#allocation2] sm:$0xf]
          %v394 = vmul.f32 %v393, %v393
          %v395 = vsel %vm386, %v394, 0.0
          %396 = vadd.xlane.f32.xlu0 %v395
          %v397 = vpop.xlane.xlu0 %396
          %v398 = vrot.slane %v397, 4
          %v399 = vadd.f32 %v397, %v398
          %v400 = vrot.slane %v399, 2
          %v401 = vadd.f32 %v399, %v400
          %v402 = vrot.slane %v401, 1
          %v403 = vadd.f32 %v401, %v402
          %s404 = vtos %v403
          %v405 = vstv %s404
          %v406 = vrsqrt.pop %v405
          %v407 = vmul.f32 %v393, %v406
          %v408 = vadd.f32 %v407, 0.0
          %v409 = vmul.f32 %v407, %v407
          %v410 = vadd.f32 %v409, 0.0
          %s411 = scalar_lea.vmem [#allocation2], 4
          %v412 = vld [vmem:[%s411] sm:$0xf]
          %v413 = vmul.f32 %v412, %v412
          %v414 = vsel %vm386, %v413, 0.0
          %415 = vadd.xlane.f32.xlu0 %v414
          %v416 = vpop.xlane.xlu0 %415
          %v417 = vrot.slane %v416, 4
          %v418 = vadd.f32 %v416, %v417
          %v419 = vrot.slane %v418, 2
          %v420 = vadd.f32 %v418, %v419
          %v421 = vrot.slane %v420, 1
          %v422 = vadd.f32 %v420, %v421
          %s423 = vtos %v422
          %v424 = vstv %s423
          %v425 = vrsqrt.pop %v424
          %v426 = vmul.f32 %v412, %v425
          %v427 = vadd.f32 %v408, %v426
          %v428 = vmul.f32 %v426, %v426
          %v429 = vadd.f32 %v410, %v428
          %s430 = scalar_lea.vmem [#allocation2], 8
          %v431 = vld [vmem:[%s430] sm:$0xf]
          %v432 = vmul.f32 %v431, %v431
          %v433 = vsel %vm386, %v432, 0.0
          %434 = vadd.xlane.f32.xlu0 %v433
          %v435 = vpop.xlane.xlu0 %434
          %v436 = vrot.slane %v435, 4
          %v437 = vadd.f32 %v435, %v436
          %v438 = vrot.slane %v437, 2
          %v439 = vadd.f32 %v437, %v438
          %v440 = vrot.slane %v439, 1
          %v441 = vadd.f32 %v439, %v440
          %s442 = vtos %v441
          %v443 = vstv %s442
          %v444 = vrsqrt.pop %v443
          %v445 = vmul.f32 %v431, %v444
          %v446 = vadd.f32 %v427, %v445
          %v447 = vmul.f32 %v445, %v445
          %v448 = vadd.f32 %v429, %v447
          %v449 = vmul.f32 %v446, %v446
          %v450 = vsub.f32 %v449, %v448
          %v451 = vmul.f32 %v450, 0.16666667
          %v452 = vsel %vm386, %v451, 0.0
          %453 = vadd.xlane.f32.xlu0 %v452
          %v454 = vpop.xlane.xlu0 %453
          %v455 = vrot.slane %v454, 4
          %v456 = vadd.f32 %v454, %v455
          %v457 = vrot.slane %v456, 2
          %v458 = vadd.f32 %v456, %v457
          %v459 = vrot.slane %v458, 1
          %v460 = vadd.f32 %v458, %v459
          %s461 = vtos %v460
          %v462 = vstv %s461
          %v463 = vadd.f32 %v462, 0.0
          %464 = vst [vmem:[%s148] sm:$0xff] %v463
        $region36: #{tpu_custom_call.1} parent=23 // pred_fallthru
          _
        %s465 = sand.u32 %s66, 1
        %s466 = scalar_lea.sflag [#allocation5], %s465
        %s467 = sand.u32 %s66, 1
        %s468 = smul.addr %s467, 8
        %s469 = scalar_lea.vmem [#allocation6], %s468
        // Predicated region
        $region37: #{tpu_custom_call.1} parent=23 // pred_check
          %p470 = pneg %p76
        $region38: #{tpu_custom_call.1} parent=23 // pred_check_branch
          %472 = sbr.rel (%p470) target = $region40
        $region39: #{tpu_custom_call.1} parent=23 // pred_region
          %s474 = ssub.s32 128, 128
          %475 = vsyncadd %s466, %s474
          %s476 = smul.addr %s22, 128
          %s477 = scalar_lea.hbm %s1, %s476
          %s479 = sshll.u32 %s469, 4
          %s480 = int_to_ptr.vmem [resolvable:$true] %s479
          %482 = dma.vmem_to_hbm [thread:$0]  %s480, 128, %s477, %s466
        $region40: #{tpu_custom_call.1} parent=23 // pred_fallthru
          _
      $region24: #{tpu_custom_call.1} parent=5 // pred_fallthru
        _
      %p483 = scmp.le.s32.totalorder 2, %s13
      // Predicated region
      $region41: #{tpu_custom_call.1} parent=5 // pred_check
        %p484 = pneg %p483
      $region42: #{tpu_custom_call.1} parent=5 // pred_check_branch
        %486 = sbr.rel (%p484) target = $region44
      $region43: #{tpu_custom_call.1} parent=5 // pred_region
        %s487 = ssub.s32 %s13, 2
        // Predicated region
        $region45: #{tpu_custom_call.1} parent=43 // pred_check
          %p488 = pneg %p82
        $region46: #{tpu_custom_call.1} parent=43 // pred_check_branch
          %490 = sbr.rel (%p488) target = $region48
        $region47: #{tpu_custom_call.1} parent=43 // pred_region
          %s491 = sand.u32 %s67, 1
          %s492 = scalar_lea.sflag [#allocation5], %s491
          %s493 = sand.u32 %s67, 1
          %s494 = smul.addr %s493, 8
          %s495 = scalar_lea.vmem [#allocation6], %s494
          %496 = dma.done %s492, 128
        $region48: #{tpu_custom_call.1} parent=43 // pred_fallthru
          _
      $region44: #{tpu_custom_call.1} parent=5 // pred_fallthru
        _
    $region6: #{tpu_custom_call.1} parent=1 // loop_footer
      %s17 = sadd.s32 1, %s13
    $region7: #{tpu_custom_call.1} parent=1 // loop_footer_branch
      %12 = sbr.rel target = $region3
    $region8: #{tpu_custom_call.1} parent=1 // loop_exit
      _
    %497 = vsyncpa [#allocation4], 1
    %s498 = scalar_lea.sflag [#allocation4], 1
    %499 = vsyncpa %s498, 1
    %500 = vsyncpa [#allocation5], 1
    %s501 = scalar_lea.sflag [#allocation5], 1
    %502 = vsyncpa %s501, 1

</llo_original>
